<compile_context>
chip_gen: v5e
topology: v5e:2x2
jax: 0.10.0
libtpu: 0.0.40
codegen_flags: <defaults>
</compile_context>

<pallas_src>
import functools

import jax
import jax.numpy as jnp
from jax.experimental import pallas as pl
from jax.experimental.pallas import tpu as pltpu


def _smooth_ce_rowloss_kernel(target_ref, logits_ref, out_ref, *, smoothing,
                              num_classes):
    x = logits_ref[...].astype(jnp.float32)                 # (TN, C)
    t = target_ref[...]                                     # (TN, 1) int32
    tn, c = x.shape

    # stable log-sum-exp pieces over the class (lane) dim
    m = jnp.max(x, axis=-1, keepdims=True)                  # (TN, 1)
    z = x - m                                               # (TN, C)
    lse = jnp.log(jnp.sum(jnp.exp(z), axis=-1, keepdims=True))   # (TN, 1)
    sum_z = jnp.sum(z, axis=-1, keepdims=True)               # (TN, 1)

    # z at the target class via iota-compare + row reduction (no full logp/w)
    col = jax.lax.broadcasted_iota(jnp.int32, (tn, c), 1)
    z_t = jnp.sum(jnp.where(col == t, z, jnp.float32(0.0)),
                  axis=-1, keepdims=True)                    # (TN, 1)

    # use the TRUE class count from the wrapper, not the block width
    off = jnp.float32(smoothing / (num_classes - 1.0))
    w_extra = jnp.float32(1.0 - smoothing) - off             # (1-s) - off

    out_ref[...] = lse - off * sum_z - w_extra * z_t


def _pick_tile_n(n, c):
    """Largest batch tile whose f32 logits block is ~4 MiB (mult. of 8, <=1024)."""
    budget_f32_bytes = 4 * 1024 * 1024
    t = budget_f32_bytes // (c * 4)
    t = min(t, 1024)
    t = max((t // 8) * 8, 8)
    n8 = -(-n // 8) * 8          # no point exceeding the (8-rounded) batch
    return int(min(t, n8))


def smooth_cross_entropy_loss(logits, target, smoothing=0.1, tile_n=None):
    """Pallas equivalent of SmoothCrossEntropyLoss.forward(logits, target)."""
    n, c = logits.shape
    if tile_n is None:
        tile_n = _pick_tile_n(n, c)
    target2d = target.astype(jnp.int32).reshape(n, 1)
    grid = (pl.cdiv(n, tile_n),)

    kernel = functools.partial(
        _smooth_ce_rowloss_kernel, smoothing=float(smoothing), num_classes=c
    )

    per_row = pl.pallas_call(
        kernel,
        out_shape=jax.ShapeDtypeStruct((n, 1), jnp.float32),
        grid_spec=pltpu.PrefetchScalarGridSpec(
            num_scalar_prefetch=0,
            grid=grid,
            in_specs=[
                pl.BlockSpec((tile_n, 1), lambda i: (i, 0)),   # target [N,1]
                pl.BlockSpec((tile_n, c), lambda i: (i, 0)),   # logits [N,C]
            ],
            out_specs=pl.BlockSpec((tile_n, 1), lambda i: (i, 0)),
        ),
        compiler_params=pltpu.CompilerParams(
            dimension_semantics=("parallel",),        # no carried state -> megacore OK
            vmem_limit_bytes=32 * 1024 * 1024,        # safe on v5e/v6e/v7x
        ),
    )(target2d, logits)

    # tiny final reduction (N scalars) done in the wrapper
    return jnp.mean(per_row)


def _reference(logits, target, smoothing=0.1):
    logp = jax.nn.log_softmax(logits.astype(jnp.float32), axis=-1)
    c = logits.shape[-1]
    w = jnp.full(logits.shape, smoothing / (c - 1.0), dtype=jnp.float32)
    one_hot = jax.nn.one_hot(target, c, dtype=jnp.float32)
    w = w * (1.0 - one_hot) + one_hot * (1.0 - smoothing)
    return jnp.mean(jnp.sum(-w * logp, axis=-1))


if __name__ == "__main__":
    key = jax.random.PRNGKey(0)
    k_logits, k_target = jax.random.split(key)

    N, C = 8, 32
    logits = jax.random.normal(k_logits, (N, C), dtype=jnp.float32)
    target = jax.random.randint(k_target, (N,), 0, C, dtype=jnp.int32)

    loss = smooth_cross_entropy_loss(logits, target, smoothing=0.1)
    loss = jax.block_until_ready(loss)

    ref = _reference(logits, target, smoothing=0.1)
    assert jnp.allclose(loss, ref, atol=1e-5, rtol=1e-5), (loss, ref)

    # also exercise a partial last tile (N not a multiple of tile_n) at a
    # larger shape to check block clipping + tile selection
    N2, C2 = 1000, 256
    logits2 = jax.random.normal(k_logits, (N2, C2), dtype=jnp.float32)
    target2 = jax.random.randint(k_target, (N2,), 0, C2, dtype=jnp.int32)
    loss2 = jax.block_until_ready(smooth_cross_entropy_loss(logits2, target2))
    ref2 = _reference(logits2, target2)
    assert jnp.allclose(loss2, ref2, atol=1e-4, rtol=1e-4), (loss2, ref2)

    print("KERNEL_OK")
</pallas_src>

<mosaic_0001>
module attributes {stable_mosaic.version = 11 : i64} {
  func.func @_smooth_ce_rowloss_kernel(%arg0: i32, %arg1: memref<8x1xi32, #tpu.memory_space<vmem>>, %arg2: memref<8x32xf32, #tpu.memory_space<vmem>>, %arg3: memref<8x1xf32, #tpu.memory_space<vmem>>) attributes {dimension_semantics = [#tpu.dimension_semantics<parallel>], iteration_bounds = array<i64: 1>, scalar_prefetch = 0 : i64, scratch_operands = 0 : i64, tpu.core_type = #tpu.core_type<tc>, window_params = [{transform_indices = @transform_0, window_bounds = array<i64: 8, 1>}, {transform_indices = @transform_1, window_bounds = array<i64: 8, 32>}, {transform_indices = @transform_2, window_bounds = array<i64: 8, 1>}]} {
    %c0 = arith.constant 0 : index
    %c0_0 = arith.constant 0 : index
    %0 = vector.load %arg2[%c0, %c0_0] : memref<8x32xf32, #tpu.memory_space<vmem>>, vector<8x32xf32>
    %c0_1 = arith.constant 0 : index
    %c0_2 = arith.constant 0 : index
    %1 = vector.load %arg1[%c0_1, %c0_2] : memref<8x1xi32, #tpu.memory_space<vmem>>, vector<8x1xi32>
    %cst = arith.constant dense<0xFF800000> : vector<8xf32>
    %2 = vector.multi_reduction <maximumf>, %0, %cst [1] : vector<8x32xf32> to vector<8xf32>
    %3 = vector.shape_cast %2 : vector<8xf32> to vector<8x1xf32>
    %4 = vector.broadcast %3 : vector<8x1xf32> to vector<8x32xf32>
    %5 = arith.subf %0, %4 : vector<8x32xf32>
    %6 = math.exp %5 : vector<8x32xf32>
    %cst_3 = arith.constant dense<0.000000e+00> : vector<8xf32>
    %7 = vector.multi_reduction <add>, %6, %cst_3 [1] : vector<8x32xf32> to vector<8xf32>
    %8 = vector.shape_cast %7 : vector<8xf32> to vector<8x1xf32>
    %9 = math.log %8 : vector<8x1xf32>
    %cst_4 = arith.constant dense<0.000000e+00> : vector<8xf32>
    %10 = vector.multi_reduction <add>, %5, %cst_4 [1] : vector<8x32xf32> to vector<8xf32>
    %11 = vector.shape_cast %10 : vector<8xf32> to vector<8x1xf32>
    %12 = tpu.iota {dimensions = array<i32: 1>} : vector<8x32xi32>
    %13 = vector.broadcast %1 : vector<8x1xi32> to vector<8x32xi32>
    %14 = arith.cmpi eq, %12, %13 : vector<8x32xi32>
    %cst_5 = arith.constant 0.000000e+00 : f32
    %15 = vector.broadcast %cst_5 : f32 to vector<8x32xf32>
    %16 = arith.select %14, %5, %15 : vector<8x32xi1>, vector<8x32xf32>
    %cst_6 = arith.constant dense<0.000000e+00> : vector<8xf32>
    %17 = vector.multi_reduction <add>, %16, %cst_6 [1] : vector<8x32xf32> to vector<8xf32>
    %18 = vector.shape_cast %17 : vector<8xf32> to vector<8x1xf32>
    %cst_7 = arith.constant 0.899999976 : f32
    %cst_8 = arith.constant 0.0032258064 : f32
    %19 = arith.subf %cst_7, %cst_8 : f32
    %cst_9 = arith.constant 0.0032258064 : f32
    %20 = vector.broadcast %cst_9 : f32 to vector<8x1xf32>
    %21 = arith.mulf %20, %11 : vector<8x1xf32>
    %22 = arith.subf %9, %21 : vector<8x1xf32>
    %23 = vector.broadcast %19 : f32 to vector<8x1xf32>
    %24 = arith.mulf %23, %18 : vector<8x1xf32>
    %25 = arith.subf %22, %24 : vector<8x1xf32>
    %c0_10 = arith.constant 0 : index
    %c0_11 = arith.constant 0 : index
    %26 = vector.load %arg3[%c0_10, %c0_11] : memref<8x1xf32, #tpu.memory_space<vmem>>, vector<8x1xf32>
    tpu.vector_store %arg3[%c0_10, %c0_11], %25 {strides = array<i32>} : memref<8x1xf32, #tpu.memory_space<vmem>>, vector<8x1xf32>,
    return
  }
  func.func @transform_0(%arg0: i32) -> (i32, i32) {
    %c0_i32 = arith.constant 0 : i32
    %c0_i32_0 = arith.constant 0 : i32
    return %arg0, %c0_i32 : i32, i32
  }
  func.func @transform_1(%arg0: i32) -> (i32, i32) {
    %c0_i32 = arith.constant 0 : i32
    %c0_i32_0 = arith.constant 0 : i32
    return %arg0, %c0_i32 : i32, i32
  }
  func.func @transform_2(%arg0: i32) -> (i32, i32) {
    %c0_i32 = arith.constant 0 : i32
    %c0_i32_0 = arith.constant 0 : i32
    return %arg0, %c0_i32 : i32, i32
  }
}

</mosaic_0001>

<llo_original>
// kernel: tpu_custom_call.1
$region0: #{tpu_custom_call.1}
  #allocation0 [shape = 'u32[]', space=smem, size = 0x4, offset = 0x4, fixed_abs, tag = 'smem constant byte address 0x4 - core index']
  #allocation1 [shape = 'u32[72,128]{1,0:T(1,128)}', space=vmem, size = 0x9000, scoped, tag = 'internal scratch']
  %s0 = inlined_call_operand.vmem [shape: s32[8,1], index: 0, kind: input, shape index: {}]
  %s1 = inlined_call_operand.vmem [shape: f32[8,32], index: 1, kind: input, shape index: {}]
  %s2 = inlined_call_operand.vmem [shape: f32[8,1], index: 2, kind: output, shape index: {}]
  %s3 = sld [smem:[#allocation0]]
  $region18: #{tpu_custom_call.1} parent=0
    _
  %s5 = ssub.s32 1, %s3
  %s6 = scalar_select 0, %s5, %s3
  // Predicated region
  $region2: #{tpu_custom_call.1} parent=0 // pred_check
    _
  $region3: #{tpu_custom_call.1} parent=0 // pred_check_branch
    %8 = sbr.rel (0) target = $region5
  $region4: #{tpu_custom_call.1} parent=0 // pred_region
    _
  $region5: #{tpu_custom_call.1} parent=0 // pred_fallthru
    _
  // Predicated region
  $region6: #{tpu_custom_call.1} parent=0 // pred_check
    _
  $region7: #{tpu_custom_call.1} parent=0 // pred_check_branch
    %10 = sbr.rel (0) target = $region9
  $region8: #{tpu_custom_call.1} parent=0 // pred_region
    _
  $region9: #{tpu_custom_call.1} parent=0 // pred_fallthru
    _
  %v11 = vld [vmem:[%s1] sm:$0xff]
  %v12 = vld [vmem:[%s0] sm:$0xff]
  %vm13 = vcmask 261120
  %v14 = vsel %vm13, %v11, -inf
  %15 = vmax.xlane.f32.xlu0 %v14
  %v16 = vpop.xlane.xlu0 %15
  %v17 = vsub.f32 %v11, %v16
  %v18 = vmul.f32 %v17, 1.442695
  %v19 = vpow.pop %v18
  %v20 = vsel %vm13, %v19, 0.0
  %21 = vadd.xlane.f32.xlu0 %v20
  %v22 = vpop.xlane.xlu0 %21
  %v23 = vlog2.pop %v22
  %v24 = vmul.f32 %v23, 0.6931472
  %v25 = vsel %vm13, %v17, 0.0
  %26 = vadd.xlane.f32.xlu0 %v25
  %v27 = vpop.xlane.xlu0 %26
  %v28 = vlaneseq
  %v29 = vand.u32 %v28, 127
  %30 = vset.pattern.permute.xlu0 0
  %31 = vperm.xlu0 %30, %v12
  %v32 = vpop.permute.xlu0 %31
  %vm33 = vcmp.eq.s32.totalorder %v29, %v32
  %v34 = vsel %vm33, %v17, 0.0
  %v35 = vsel %vm13, %v34, 0.0
  %36 = vadd.xlane.f32.xlu0 %v35
  %v37 = vpop.xlane.xlu0 %36
  %v38 = vmul.f32 %v27, 0.0032258064
  %v39 = vsub.f32 %v24, %v38
  %v40 = vmul.f32 %v37, 0.8967742
  %v41 = vsub.f32 %v39, %v40
  %vm42 = vcmask 7168
  %43 = vst.msk [vmem:[%s2] sm:$0xff] %vm42, %v41
  // Predicated region
  $region10: #{tpu_custom_call.1} parent=0 // pred_check
    _
  $region11: #{tpu_custom_call.1} parent=0 // pred_check_branch
    %45 = sbr.rel (0) target = $region13
  $region12: #{tpu_custom_call.1} parent=0 // pred_region
    _
  $region13: #{tpu_custom_call.1} parent=0 // pred_fallthru
    _
  // Predicated region
  $region14: #{tpu_custom_call.1} parent=0 // pred_check
    _
  $region15: #{tpu_custom_call.1} parent=0 // pred_check_branch
    %47 = sbr.rel (0) target = $region17
  $region16: #{tpu_custom_call.1} parent=0 // pred_region
    _
  $region17: #{tpu_custom_call.1} parent=0 // pred_fallthru
    _

</llo_original>
